<compile_context>
chip_gen: v5e
topology: v5e:2x2
jax: 0.10.0
libtpu: 0.0.40
codegen_flags: <defaults>
</compile_context>

<pallas_src>
import jax
import jax.numpy as jnp
from jax.experimental import pallas as pl
from jax.experimental.pallas import tpu as pltpu


# ----------------------------------------------------------------------------
# Pallas kernel: fused [(1x1 conv -> folded BN -> ReLU)] x L + max over nsample
# ----------------------------------------------------------------------------
def _make_mlp_max_kernel(num_layers, tb, tp, nsample, c_last):
    def kernel(*refs):
        x_ref = refs[0]
        out_ref = refs[-1]
        wb = refs[1:-1]                                  # alternating (W, b) refs

        x = x_ref[...]                                   # (TB, TP, S, C_in) bf16
        c_in = x.shape[-1]
        h = x.reshape(tb * tp * nsample, c_in)           # rows: b-major, p, s-minor

        for j in range(num_layers):
            w = wb[2 * j][...]                           # (C_prev, C_next) bf16
            b = wb[2 * j + 1][...]                       # (1, C_next)      f32
            acc = jnp.dot(h, w, preferred_element_type=jnp.float32) + b
            acc = jnp.maximum(acc, 0.0)                  # ReLU in f32 accum
            h = acc.astype(jnp.bfloat16) if j + 1 < num_layers else acc

        # max over nsample (sublane-axis reduction, no unrolled slice loop)
        hm = jnp.max(h.reshape(tb * tp, nsample, c_last), axis=1)   # (TB*TP, C_last)
        hm = hm.reshape(tb, tp, c_last)

        # single batched transpose + store -> lane-dense (C_out, npoint) blocks
        out_ref[...] = jnp.swapaxes(hm, 1, 2).astype(out_ref.dtype)
    return kernel


# ----------------------------------------------------------------------------
# VMEM-budget-driven tile selection
# ----------------------------------------------------------------------------
def _round_up(n, m):
    return -(-n // m) * m


def _vmem_capacity_bytes():
    try:
        info = pltpu.get_tpu_info()
        for name in ("vmem_capacity_bytes", "vmem_bytes", "vmem_size_bytes"):
            cap = getattr(info, name, None)
            if cap:
                return int(cap)
    except Exception:
        pass
    return 64 << 20          # conservative fallback (v7x-sized VMEM)


def _block_vmem_bytes(tb, tp, s, c, layer_dims):
    """Rough lane/sublane-padded VMEM footprint of one grid step."""
    lp = lambda n: _round_up(n, 128)
    c_out = layer_dims[-1][1]
    c_max = max([c] + [cn for _, cn in layer_dims])
    m = tb * tp * s
    bytes_in = 2 * tb * tp * _round_up(s, 16) * lp(c) * 2           # 2x-buffered bf16 input
    bytes_out = 2 * tb * _round_up(c_out, 8) * lp(tp) * 4           # 2x-buffered f32 output
    bytes_w = 2 * sum(_round_up(cp, 16) * lp(cn) * 2 + lp(cn) * 4
                      for cp, cn in layer_dims)                     # resident weights/biases
    bytes_act = (_round_up(m, 8) * lp(c_max) * 4                    # f32 accumulator
                 + _round_up(m, 16) * lp(c_max) * 2)                # bf16 inter-layer copy
    return bytes_in + bytes_out + bytes_w + bytes_act


def _choose_tiles(b, p, s, c, layer_dims, vmem_cap):
    budget = int(vmem_cap * 0.6)
    max_tp = 128 if vmem_cap <= (64 << 20) else 256       # v7x: 64 MiB -> cap at 128

    # ---- point tile --------------------------------------------------------
    if p <= max_tp:
        tp_cands = [p] + ([128] if (p > 128 and p % 128 == 0) else [])
        p_pad = p
    elif p % 128 == 0:
        tp_cands = [t for t in (256, 128) if t <= max_tp and p % t == 0]
        p_pad = p
    else:
        tp_cands = [128]                                   # pad npoint to 128-aligned
        p_pad = _round_up(p, 128)

    tp = tp_cands[-1]
    for t in tp_cands:
        if _block_vmem_bytes(1, t, s, c, layer_dims) <= budget:
            tp = t
            break

    # ---- batch tile (pack batches while keeping >= 2 grid steps) -----------
    grid_p = p_pad // tp
    tb = 1
    for cand in range(b, 0, -1):
        if b % cand:
            continue
        enough_steps = (b // cand) * grid_p >= 2 or b * grid_p < 2
        if enough_steps and _block_vmem_bytes(cand, tp, s, c, layer_dims) <= budget:
            tb = cand
            break
    return tb, tp, p_pad


# ----------------------------------------------------------------------------
# Fused MLP + max wrapper
# ----------------------------------------------------------------------------
def mlp_and_max(grouped, weights, biases):
    """grouped: (B, npoint, nsample, C_in) bf16 (C_in may include zero pad)
       -> (B, C_out, npoint) f32."""
    grouped = grouped.astype(jnp.bfloat16)
    B, P, S, C = grouped.shape
    num_layers = len(weights)
    c_out = weights[-1].shape[1]

    weights = list(weights)
    # pad first-layer weight rows to match the (zero-padded) C_in -- free
    if weights[0].shape[0] < C:
        weights[0] = jnp.pad(weights[0], ((0, C - weights[0].shape[0]), (0, 0)))
    weights = [w.astype(jnp.bfloat16) for w in weights]
    biases = [b.reshape(1, -1).astype(jnp.float32) for b in biases]
    layer_dims = [(w.shape[0], w.shape[1]) for w in weights]

    vmem_cap = _vmem_capacity_bytes()
    TB, TP, P_pad = _choose_tiles(B, P, S, C, layer_dims, vmem_cap)
    if P_pad != P:
        # TODO(synk): rare path (npoint not 128-divisible and > tile); padded
        # query rows go through the MLP and are sliced off after the kernel.
        grouped = jnp.pad(grouped, ((0, 0), (0, P_pad - P), (0, 0), (0, 0)))

    in_specs = [pl.BlockSpec((TB, TP, S, C), lambda b, p: (b, p, 0, 0))]
    args = [grouped]
    for w, bias in zip(weights, biases):
        in_specs.append(pl.BlockSpec(w.shape, lambda b, p: (0, 0)))      # resident
        in_specs.append(pl.BlockSpec(bias.shape, lambda b, p: (0, 0)))   # resident
        args.append(w)
        args.append(bias)

    flops = 2 * B * P_pad * S * sum(cp * cn for cp, cn in layer_dims)
    bytes_accessed = (grouped.size * grouped.dtype.itemsize
                      + sum(w.size * 2 + b.size * 4 for w, b in zip(weights, biases))
                      + B * c_out * P_pad * 4)
    need = _block_vmem_bytes(TB, TP, S, C, layer_dims)
    vmem_limit = int(min(vmem_cap * 9 // 10, max(need + (4 << 20), 32 << 20)))

    out = pl.pallas_call(
        _make_mlp_max_kernel(num_layers, TB, TP, S, c_out),
        out_shape=jax.ShapeDtypeStruct((B, c_out, P_pad), jnp.float32),
        grid=(B // TB, P_pad // TP),
        in_specs=in_specs,
        out_specs=pl.BlockSpec((TB, c_out, TP), lambda b, p: (b, 0, p)),
        compiler_params=pltpu.CompilerParams(
            dimension_semantics=("parallel", "parallel"),
            vmem_limit_bytes=vmem_limit),
        cost_estimate=pl.CostEstimate(flops=flops, transcendentals=0,
                                      bytes_accessed=bytes_accessed),
    )(*args)
    return out[:, :, :P] if P_pad != P else out


# ----------------------------------------------------------------------------
# Sampling / grouping utilities (plain JAX glue, matching PointNet++ utils)
# ----------------------------------------------------------------------------
def square_distance(src, dst):
    # src: (B, S, 3), dst: (B, N, 3) -> (B, S, N); MXU matmul form
    d = -2.0 * jnp.einsum('bsc,bnc->bsn', src, dst)
    d = d + jnp.sum(src ** 2, axis=-1)[:, :, None]
    d = d + jnp.sum(dst ** 2, axis=-1)[:, None, :]
    return d


def index_points(points, idx):
    # points: (B, N, C), idx: (B, ...) int32 -> (B, ..., C)
    return jax.vmap(lambda p, i: p[i])(points, idx)


def farthest_point_sample(xyz, npoint):
    # TODO(synk): deterministic start at index 0 (PyTorch reference uses a
    # random start), so per-sample outputs differ from the reference.
    B, N, _ = xyz.shape

    def body(i, state):
        centroids, distance, farthest = state
        centroids = centroids.at[:, i].set(farthest)
        centroid = jax.vmap(lambda p, f: p[f])(xyz, farthest)[:, None, :]  # (B,1,3)
        dist = jnp.sum((xyz - centroid) ** 2, axis=-1)                     # (B,N)
        distance = jnp.minimum(distance, dist)
        farthest = jnp.argmax(distance, axis=-1).astype(jnp.int32)
        return centroids, distance, farthest

    centroids = jnp.zeros((B, npoint), dtype=jnp.int32)
    distance = jnp.full((B, N), 1e10, dtype=jnp.float32)
    farthest = jnp.zeros((B,), dtype=jnp.int32)
    centroids, _, _ = jax.lax.fori_loop(0, npoint, body,
                                        (centroids, distance, farthest))
    return centroids


def query_ball_point(radius, nsample, xyz, new_xyz):
    B, N, _ = xyz.shape
    S = new_xyz.shape[1]
    sqrdists = square_distance(new_xyz, xyz)                     # (B,S,N)
    group_idx = jnp.broadcast_to(jnp.arange(N, dtype=jnp.int32), (B, S, N))
    group_idx = jnp.where(sqrdists > radius ** 2, N, group_idx)
    group_idx = jnp.sort(group_idx, axis=-1)[:, :, :nsample]
    group_first = jnp.broadcast_to(group_idx[:, :, :1], (B, S, nsample))
    group_idx = jnp.where(group_idx == N, group_first, group_idx)
    return group_idx


# ----------------------------------------------------------------------------
# Parameters (deterministic init) with eval-mode BatchNorm folded into the conv
# ----------------------------------------------------------------------------
def init_params(key, in_channel, mlp_list, dtype=jnp.float32):
    # TODO(synk): BatchNorm is applied in inference mode (gamma=1, beta=0,
    # running_mean=0, running_var=1, eps=1e-5) and folded into the conv;
    # PyTorch training-mode batch statistics are not reproduced.
    eps = 1e-5
    params = []
    for branch in mlp_list:
        ws, bs = [], []
        c_prev = in_channel + 3
        for c_out in branch:
            key, k1, k2 = jax.random.split(key, 3)
            w = jax.random.normal(k1, (c_prev, c_out), dtype) / jnp.sqrt(
                jnp.asarray(c_prev, dtype))
            b = jax.random.normal(k2, (c_out,), dtype) * 0.01
            scale = 1.0 / jnp.sqrt(1.0 + eps)     # folded BN scale
            ws.append(w * scale)
            bs.append((b * scale).reshape(1, c_out))
            c_prev = c_out
        params.append((ws, bs))
    return params


# ----------------------------------------------------------------------------
# Full forward pass (matches PointNetSetAbstractionMsg.forward semantics)
# ----------------------------------------------------------------------------
def pointnet_sa_msg_forward(xyz, points, params, npoint, radius_list,
                            nsample_list):
    # TODO(synk): npoint=None path (sample_and_group_all) not implemented.
    B, N, _ = xyz.shape
    fps_idx = farthest_point_sample(xyz, npoint)
    new_xyz = index_points(xyz, fps_idx)                         # (B, npoint, 3)
    points_bf16 = points.astype(jnp.bfloat16) if points is not None else None

    new_points_list = []
    for i, (radius, nsample) in enumerate(zip(radius_list, nsample_list)):
        idx = query_ball_point(radius, nsample, xyz, new_xyz)    # (B, P, S)
        # pad nsample to a multiple of 16 by duplicating the first neighbour
        # (max over nsample is invariant to duplicates)
        s_pad = (-nsample) % 16
        if s_pad:
            idx = jnp.concatenate(
                [idx, jnp.broadcast_to(idx[:, :, :1], (B, npoint, s_pad))],
                axis=-1)
        S = nsample + s_pad

        # TODO(synk): the gather still materializes the nsample-expanded tensor
        # in HBM (now in bf16); an in-kernel gather via scalar-prefetched idx
        # would roughly halve HBM traffic for this branch.
        grouped_xyz = (index_points(xyz, idx)
                       - new_xyz[:, :, None, :]).astype(jnp.bfloat16)
        parts = [grouped_xyz]
        c_in = 3
        if points is not None:
            parts.append(index_points(points_bf16, idx))         # bf16 gather
            c_in += points.shape[-1]
        c_pad = (-c_in) % 16                                     # fold pad into concat
        if c_pad:
            parts.append(jnp.zeros((B, npoint, S, c_pad), jnp.bfloat16))
        grouped = jnp.concatenate(parts, axis=-1)                # (B, P, S, C16) bf16

        ws, bs = params[i]
        new_points_list.append(mlp_and_max(grouped, ws, bs))     # (B, C_out, P)
    new_points_concat = jnp.concatenate(new_points_list, axis=1) # (B, C', P)
    return new_xyz, new_points_concat


# ----------------------------------------------------------------------------
if __name__ == "__main__":
    key = jax.random.PRNGKey(0)
    k_xyz, k_pts, k_par = jax.random.split(key, 3)

    B, N, D = 2, 32, 4
    npoint = 8
    radius_list = [0.5, 1.0]
    nsample_list = [8, 16]
    mlp_list = [[16, 16, 32], [16, 32, 64]]
    in_channel = D

    xyz = jax.random.uniform(k_xyz, (B, N, 3), dtype=jnp.float32)
    points = jax.random.normal(k_pts, (B, N, D), dtype=jnp.float32)
    params = init_params(k_par, in_channel, mlp_list)

    new_xyz, new_points = pointnet_sa_msg_forward(
        xyz, points, params, npoint, radius_list, nsample_list)
    jax.block_until_ready((new_xyz, new_points))

    assert new_xyz.shape == (B, npoint, 3)
    assert new_points.shape == (B, sum(m[-1] for m in mlp_list), npoint)
    print("KERNEL_OK")
</pallas_src>

<mosaic_0001>
module attributes {stable_mosaic.version = 11 : i64} {
  func.func @kernel(%arg0: i32, %arg1: i32, %arg2: memref<1x8x16x16xbf16, #tpu.memory_space<vmem>>, %arg3: memref<16x16xbf16, #tpu.memory_space<vmem>>, %arg4: memref<1x16xf32, #tpu.memory_space<vmem>>, %arg5: memref<16x16xbf16, #tpu.memory_space<vmem>>, %arg6: memref<1x16xf32, #tpu.memory_space<vmem>>, %arg7: memref<16x32xbf16, #tpu.memory_space<vmem>>, %arg8: memref<1x32xf32, #tpu.memory_space<vmem>>, %arg9: memref<1x32x8xf32, #tpu.memory_space<vmem>>) attributes {dimension_semantics = [#tpu.dimension_semantics<parallel>, #tpu.dimension_semantics<parallel>], iteration_bounds = array<i64: 2, 1>, scalar_prefetch = 0 : i64, scratch_operands = 0 : i64, tpu.core_type = #tpu.core_type<tc>, window_params = [{transform_indices = @transform_0, window_bounds = array<i64: 1, 8, 16, 16>}, {pipeline_mode = #tpu.pipeline_mode<synchronous>, transform_indices = @transform_1, window_bounds = array<i64: 16, 16>}, {pipeline_mode = #tpu.pipeline_mode<synchronous>, transform_indices = @transform_2, window_bounds = array<i64: 1, 16>}, {pipeline_mode = #tpu.pipeline_mode<synchronous>, transform_indices = @transform_3, window_bounds = array<i64: 16, 16>}, {pipeline_mode = #tpu.pipeline_mode<synchronous>, transform_indices = @transform_4, window_bounds = array<i64: 1, 16>}, {pipeline_mode = #tpu.pipeline_mode<synchronous>, transform_indices = @transform_5, window_bounds = array<i64: 16, 32>}, {pipeline_mode = #tpu.pipeline_mode<synchronous>, transform_indices = @transform_6, window_bounds = array<i64: 1, 32>}, {transform_indices = @transform_7, window_bounds = array<i64: 1, 32, 8>}]} {
    %c0 = arith.constant 0 : index
    %c0_0 = arith.constant 0 : index
    %c0_1 = arith.constant 0 : index
    %c0_2 = arith.constant 0 : index
    %0 = vector.load %arg2[%c0, %c0_0, %c0_1, %c0_2] : memref<1x8x16x16xbf16, #tpu.memory_space<vmem>>, vector<1x8x16x16xbf16>
    %1 = vector.shape_cast %0 : vector<1x8x16x16xbf16> to vector<128x16xbf16>
    %c0_3 = arith.constant 0 : index
    %c0_4 = arith.constant 0 : index
    %2 = vector.load %arg3[%c0_3, %c0_4] : memref<16x16xbf16, #tpu.memory_space<vmem>>, vector<16x16xbf16>
    %c0_5 = arith.constant 0 : index
    %c0_6 = arith.constant 0 : index
    %3 = vector.load %arg4[%c0_5, %c0_6] : memref<1x16xf32, #tpu.memory_space<vmem>>, vector<1x16xf32>
    %cst = arith.constant dense<0.000000e+00> : vector<128x16xf32>
    %4 = tpu.matmul %1, %2, %cst {dimension_numbers = #tpu.dot_dimension_numbers<[1], [0], [0], [1], [0, 0, 1, 1], [], []>} : vector<128x16xbf16>, vector<16x16xbf16>, vector<128x16xf32> -> vector<128x16xf32>
    %5 = vector.broadcast %3 : vector<1x16xf32> to vector<128x16xf32>
    %6 = arith.addf %4, %5 : vector<128x16xf32>
    %cst_7 = arith.constant 0.000000e+00 : f32
    %7 = vector.broadcast %cst_7 : f32 to vector<128x16xf32>
    %8 = arith.maximumf %6, %7 : vector<128x16xf32>
    %9 = arith.truncf %8 : vector<128x16xf32> to vector<128x16xbf16>
    %c0_8 = arith.constant 0 : index
    %c0_9 = arith.constant 0 : index
    %10 = vector.load %arg5[%c0_8, %c0_9] : memref<16x16xbf16, #tpu.memory_space<vmem>>, vector<16x16xbf16>
    %c0_10 = arith.constant 0 : index
    %c0_11 = arith.constant 0 : index
    %11 = vector.load %arg6[%c0_10, %c0_11] : memref<1x16xf32, #tpu.memory_space<vmem>>, vector<1x16xf32>
    %cst_12 = arith.constant dense<0.000000e+00> : vector<128x16xf32>
    %12 = tpu.matmul %9, %10, %cst_12 {dimension_numbers = #tpu.dot_dimension_numbers<[1], [0], [0], [1], [0, 0, 1, 1], [], []>} : vector<128x16xbf16>, vector<16x16xbf16>, vector<128x16xf32> -> vector<128x16xf32>
    %13 = vector.broadcast %11 : vector<1x16xf32> to vector<128x16xf32>
    %14 = arith.addf %12, %13 : vector<128x16xf32>
    %cst_13 = arith.constant 0.000000e+00 : f32
    %15 = vector.broadcast %cst_13 : f32 to vector<128x16xf32>
    %16 = arith.maximumf %14, %15 : vector<128x16xf32>
    %17 = arith.truncf %16 : vector<128x16xf32> to vector<128x16xbf16>
    %c0_14 = arith.constant 0 : index
    %c0_15 = arith.constant 0 : index
    %18 = vector.load %arg7[%c0_14, %c0_15] : memref<16x32xbf16, #tpu.memory_space<vmem>>, vector<16x32xbf16>
    %c0_16 = arith.constant 0 : index
    %c0_17 = arith.constant 0 : index
    %19 = vector.load %arg8[%c0_16, %c0_17] : memref<1x32xf32, #tpu.memory_space<vmem>>, vector<1x32xf32>
    %cst_18 = arith.constant dense<0.000000e+00> : vector<128x32xf32>
    %20 = tpu.matmul %17, %18, %cst_18 {dimension_numbers = #tpu.dot_dimension_numbers<[1], [0], [0], [1], [0, 0, 1, 1], [], []>} : vector<128x16xbf16>, vector<16x32xbf16>, vector<128x32xf32> -> vector<128x32xf32>
    %21 = vector.broadcast %19 : vector<1x32xf32> to vector<128x32xf32>
    %22 = arith.addf %20, %21 : vector<128x32xf32>
    %cst_19 = arith.constant 0.000000e+00 : f32
    %23 = vector.broadcast %cst_19 : f32 to vector<128x32xf32>
    %24 = arith.maximumf %22, %23 : vector<128x32xf32>
    %25 = vector.shape_cast %24 : vector<128x32xf32> to vector<8x16x32xf32>
    %cst_20 = arith.constant dense<0xFF800000> : vector<8x32xf32>
    %26 = vector.multi_reduction <maximumf>, %25, %cst_20 [1] : vector<8x16x32xf32> to vector<8x32xf32>
    %27 = vector.shape_cast %26 : vector<8x32xf32> to vector<1x8x32xf32>
    %28 = tpu.transpose %27, [0, 2, 1] : vector<1x8x32xf32> -> vector<1x32x8xf32>
    %c0_21 = arith.constant 0 : index
    %c0_22 = arith.constant 0 : index
    %c0_23 = arith.constant 0 : index
    %29 = vector.load %arg9[%c0_21, %c0_22, %c0_23] : memref<1x32x8xf32, #tpu.memory_space<vmem>>, vector<1x32x8xf32>
    tpu.vector_store %arg9[%c0_21, %c0_22, %c0_23], %28 {strides = array<i32>} : memref<1x32x8xf32, #tpu.memory_space<vmem>>, vector<1x32x8xf32>,
    return
  }
  func.func @transform_0(%arg0: i32, %arg1: i32) -> (i32, i32, i32, i32) {
    %c0_i32 = arith.constant 0 : i32
    %c0_i32_0 = arith.constant 0 : i32
    %c0_i32_1 = arith.constant 0 : i32
    return %arg0, %arg1, %c0_i32, %c0_i32_0 : i32, i32, i32, i32
  }
  func.func @transform_1(%arg0: i32, %arg1: i32) -> (i32, i32) {
    %c0_i32 = arith.constant 0 : i32
    %c0_i32_0 = arith.constant 0 : i32
    %c0_i32_1 = arith.constant 0 : i32
    return %c0_i32, %c0_i32_0 : i32, i32
  }
  func.func @transform_2(%arg0: i32, %arg1: i32) -> (i32, i32) {
    %c0_i32 = arith.constant 0 : i32
    %c0_i32_0 = arith.constant 0 : i32
    %c0_i32_1 = arith.constant 0 : i32
    return %c0_i32, %c0_i32_0 : i32, i32
  }
  func.func @transform_3(%arg0: i32, %arg1: i32) -> (i32, i32) {
    %c0_i32 = arith.constant 0 : i32
    %c0_i32_0 = arith.constant 0 : i32
    %c0_i32_1 = arith.constant 0 : i32
    return %c0_i32, %c0_i32_0 : i32, i32
  }
  func.func @transform_4(%arg0: i32, %arg1: i32) -> (i32, i32) {
    %c0_i32 = arith.constant 0 : i32
    %c0_i32_0 = arith.constant 0 : i32
    %c0_i32_1 = arith.constant 0 : i32
    return %c0_i32, %c0_i32_0 : i32, i32
  }
  func.func @transform_5(%arg0: i32, %arg1: i32) -> (i32, i32) {
    %c0_i32 = arith.constant 0 : i32
    %c0_i32_0 = arith.constant 0 : i32
    %c0_i32_1 = arith.constant 0 : i32
    return %c0_i32, %c0_i32_0 : i32, i32
  }
  func.func @transform_6(%arg0: i32, %arg1: i32) -> (i32, i32) {
    %c0_i32 = arith.constant 0 : i32
    %c0_i32_0 = arith.constant 0 : i32
    %c0_i32_1 = arith.constant 0 : i32
    return %c0_i32, %c0_i32_0 : i32, i32
  }
  func.func @transform_7(%arg0: i32, %arg1: i32) -> (i32, i32, i32) {
    %c0_i32 = arith.constant 0 : i32
    %c0_i32_0 = arith.constant 0 : i32
    return %arg0, %c0_i32, %arg1 : i32, i32, i32
  }
}

</mosaic_0001>

<llo_original>
// kernel: tpu_custom_call.1
$region0: #{tpu_custom_call.1}
  #allocation0 [shape = 'u32[]', space=smem, size = 0x4, offset = 0x4, fixed_abs, tag = 'smem constant byte address 0x4 - core index']
  #allocation1 [shape = 'u32[72,128]{1,0:T(1,128)}', space=vmem, size = 0x9000, scoped, tag = 'internal scratch']
  %s0 = inlined_call_operand.hbm [shape: bf16[2,8,16,16], index: 0, kind: input, shape index: {}]
  %s1 = inlined_call_operand.hbm [shape: bf16[16,16], index: 1, kind: input, shape index: {}]
  %s2 = inlined_call_operand.vmem [shape: f32[1,16], index: 2, kind: input, shape index: {}]
  %s3 = inlined_call_operand.hbm [shape: bf16[16,16], index: 3, kind: input, shape index: {}]
  %s4 = inlined_call_operand.vmem [shape: f32[1,16], index: 4, kind: input, shape index: {}]
  %s5 = inlined_call_operand.hbm [shape: bf16[16,32], index: 5, kind: input, shape index: {}]
  %s6 = inlined_call_operand.vmem [shape: f32[1,32], index: 6, kind: input, shape index: {}]
  %s7 = inlined_call_operand.vmem [shape: f32[2,32,8], index: 7, kind: output, shape index: {}]
  %s8 = sld [smem:[#allocation0]]
  $region77: #{tpu_custom_call.1} parent=0
    _
  %s10 = ssub.s32 1, %s8
  %s11 = scalar_select 0, %s10, %s8
  $region1: #{tpu_custom_call.1} parent=0
    #allocation2 [shape = 'u8[65536]{0}', space=vmem, size = 0x10000, scoped, tag = 'input window, operand 0']
    #allocation3 [shape = 's32[2]{0}', space=sflag, size = 0x8, scoped, tag = 'scoped memory for tpu_custom_call.1']
    #allocation4 [shape = 'u8[4096]{0}', space=vmem, size = 0x1000, scoped, tag = 'input window, operand 1, single buffered']
    #allocation5 [shape = 's32[1]{0}', space=sflag, size = 0x4, scoped, tag = 'scoped memory for tpu_custom_call.1']
    #allocation6 [shape = 'u8[4096]{0}', space=vmem, size = 0x1000, scoped, tag = 'input window, operand 3, single buffered']
    #allocation7 [shape = 'u8[4096]{0}', space=vmem, size = 0x1000, scoped, tag = 'input window, operand 5, single buffered']
    #allocation8 [shape = 's32[1]{0}', space=sflag, size = 0x4, scoped, tag = 'scoped memory for tpu_custom_call.1']
    %12 = vsyncpa [#allocation3], 0
    %s13 = scalar_lea.sflag [#allocation3], 1
    %14 = vsyncpa %s13, 0
    %15 = vsyncpa [#allocation5], 0
    %16 = vsyncpa [#allocation8], 0
    loop: start=0, step=1, limit=4
    $region2: #{tpu_custom_call.1} parent=1 // loop_pre_header
      _
    $region3: #{tpu_custom_call.1} parent=1 // loop_header
      %s18 = sphi 0, %s22
      %p19 = scmp.ge.s32.totalorder %s18, 4
      %s25 = sphi 0, %s37
      %s26 = sphi 0, %s33
      %s27 = sphi 0, %s25
      %s28 = sphi 0, %s26
      %s29 = sphi 0, %s27
      %s30 = sphi 0, %s28
      %s42 = sphi 0, %s44
      %s45 = sphi 0, %s42
      %s46 = sphi 0, %s45
      %s62 = sphi 0, %s46
      %s66 = sphi 0, %s66
      %s68 = sphi 0, %s66
      %s69 = sphi 0, %s68
      %s83 = sphi 0, %s69
      %s87 = sphi 0, %s87
      %s89 = sphi 0, %s87
      %s90 = sphi 0, %s89
      %s104 = sphi 0, %s90
      %s108 = sphi 0, %s108
      %s110 = sphi 0, %s108
      %s111 = sphi 0, %s110
      %s125 = sphi 0, %s111
      %s129 = sphi 0, %s129
      %s131 = sphi 0, %s129
      %s132 = sphi 0, %s131
      %s146 = sphi 0, %s132
      %s150 = sphi 0, %s150
      %s152 = sphi 0, %s150
      %s153 = sphi 0, %s152
      %s167 = sphi 0, %s153
      %s171 = sphi 0, %s171
      %s173 = sphi 0, %s171
      %s174 = sphi 0, %s173
      %s188 = sphi 0, %s174
      %s196 = sphi 0, %s198
      %s199 = sphi 0, %s196
      %s200 = sphi 0, %s199
      %s216 = sphi 0, %s200
    $region4: #{tpu_custom_call.1} parent=1 // loop_header_branch
      %21 = sbr.rel (%p19) target = $region8
    $region5: #{tpu_custom_call.1} parent=1 // loop_body
      %s23 = ssub.s32 %s18, 1
      %s24 = ssub.s32 %s18, 2
      %s31 = sadd.s32 1, %s26
      %p32 = scmp.ge.s32.totalorder %s31, 1
      %s33 = scalar_select %p32, 0, %s31
      %s34 = sadd.s32 1, %s25
      %s35 = scalar_select %p32, %s34, %s25
      %p36 = scmp.ge.s32.totalorder %s35, 2
      %s37 = scalar_select %p36, 0, %s35
      %s38 = ssub.s32 %s25, %s37
      %s39 = ssub.s32 %s26, %s33
      %s40 = sor.u32 %s38, %s39
      %p41 = scmp.eq.s32.totalorder %s40, 0
      %s43 = sadd.s32 %s42, 1
      %s44 = scalar_select %p41, %s42, %s43
      %p47 = pneg %p41
      %p48 = scmp.eq.s32.totalorder %s18, 1
      %p49 = por %p47, %p48
      %p50 = scmp.ne.s32.totalorder %s42, %s45
      %p51 = scmp.eq.s32.totalorder %s18, 0
      %p52 = por %p50, %p51
      %p53 = scmp.ne.s32.totalorder %s42, %s45
      %p54 = scmp.eq.s32.totalorder %s23, 1
      %p55 = por %p53, %p54
      %p56 = scmp.ne.s32.totalorder %s45, %s46
      %p57 = scmp.eq.s32.totalorder %s23, 0
      %p58 = por %p56, %p57
      %p59 = scmp.ne.s32.totalorder %s45, %s46
      %p60 = scmp.eq.s32.totalorder %s24, 1
      %p61 = por %p59, %p60
      %p63 = scmp.ne.s32.totalorder %s46, %s62
      %p64 = scmp.eq.s32.totalorder %s24, 0
      %p65 = por %p63, %p64
      %s67 = sadd.s32 %s66, 1
      %p70 = scmp.eq.s32.totalorder %s18, 1
      %p71 = scmp.ne.s32.totalorder %s66, %s68
      %p72 = scmp.eq.s32.totalorder %s18, 0
      %p73 = por %p71, %p72
      %p74 = scmp.ne.s32.totalorder %s66, %s68
      %p75 = scmp.eq.s32.totalorder %s23, 1
      %p76 = por %p74, %p75
      %p77 = scmp.ne.s32.totalorder %s68, %s69
      %p78 = scmp.eq.s32.totalorder %s23, 0
      %p79 = por %p77, %p78
      %p80 = scmp.ne.s32.totalorder %s68, %s69
      %p81 = scmp.eq.s32.totalorder %s24, 1
      %p82 = por %p80, %p81
      %p84 = scmp.ne.s32.totalorder %s69, %s83
      %p85 = scmp.eq.s32.totalorder %s24, 0
      %p86 = por %p84, %p85
      %s88 = sadd.s32 %s87, 1
      %p91 = scmp.eq.s32.totalorder %s18, 1
      %p92 = scmp.ne.s32.totalorder %s87, %s89
      %p93 = scmp.eq.s32.totalorder %s18, 0
      %p94 = por %p92, %p93
      %p95 = scmp.ne.s32.totalorder %s87, %s89
      %p96 = scmp.eq.s32.totalorder %s23, 1
      %p97 = por %p95, %p96
      %p98 = scmp.ne.s32.totalorder %s89, %s90
      %p99 = scmp.eq.s32.totalorder %s23, 0
      %p100 = por %p98, %p99
      %p101 = scmp.ne.s32.totalorder %s89, %s90
      %p102 = scmp.eq.s32.totalorder %s24, 1
      %p103 = por %p101, %p102
      %p105 = scmp.ne.s32.totalorder %s90, %s104
      %p106 = scmp.eq.s32.totalorder %s24, 0
      %p107 = por %p105, %p106
      %s109 = sadd.s32 %s108, 1
      %p112 = scmp.eq.s32.totalorder %s18, 1
      %p113 = scmp.ne.s32.totalorder %s108, %s110
      %p114 = scmp.eq.s32.totalorder %s18, 0
      %p115 = por %p113, %p114
      %p116 = scmp.ne.s32.totalorder %s108, %s110
      %p117 = scmp.eq.s32.totalorder %s23, 1
      %p118 = por %p116, %p117
      %p119 = scmp.ne.s32.totalorder %s110, %s111
      %p120 = scmp.eq.s32.totalorder %s23, 0
      %p121 = por %p119, %p120
      %p122 = scmp.ne.s32.totalorder %s110, %s111
      %p123 = scmp.eq.s32.totalorder %s24, 1
      %p124 = por %p122, %p123
      %p126 = scmp.ne.s32.totalorder %s111, %s125
      %p127 = scmp.eq.s32.totalorder %s24, 0
      %p128 = por %p126, %p127
      %s130 = sadd.s32 %s129, 1
      %p133 = scmp.eq.s32.totalorder %s18, 1
      %p134 = scmp.ne.s32.totalorder %s129, %s131
      %p135 = scmp.eq.s32.totalorder %s18, 0
      %p136 = por %p134, %p135
      %p137 = scmp.ne.s32.totalorder %s129, %s131
      %p138 = scmp.eq.s32.totalorder %s23, 1
      %p139 = por %p137, %p138
      %p140 = scmp.ne.s32.totalorder %s131, %s132
      %p141 = scmp.eq.s32.totalorder %s23, 0
      %p142 = por %p140, %p141
      %p143 = scmp.ne.s32.totalorder %s131, %s132
      %p144 = scmp.eq.s32.totalorder %s24, 1
      %p145 = por %p143, %p144
      %p147 = scmp.ne.s32.totalorder %s132, %s146
      %p148 = scmp.eq.s32.totalorder %s24, 0
      %p149 = por %p147, %p148
      %s151 = sadd.s32 %s150, 1
      %p154 = scmp.eq.s32.totalorder %s18, 1
      %p155 = scmp.ne.s32.totalorder %s150, %s152
      %p156 = scmp.eq.s32.totalorder %s18, 0
      %p157 = por %p155, %p156
      %p158 = scmp.ne.s32.totalorder %s150, %s152
      %p159 = scmp.eq.s32.totalorder %s23, 1
      %p160 = por %p158, %p159
      %p161 = scmp.ne.s32.totalorder %s152, %s153
      %p162 = scmp.eq.s32.totalorder %s23, 0
      %p163 = por %p161, %p162
      %p164 = scmp.ne.s32.totalorder %s152, %s153
      %p165 = scmp.eq.s32.totalorder %s24, 1
      %p166 = por %p164, %p165
      %p168 = scmp.ne.s32.totalorder %s153, %s167
      %p169 = scmp.eq.s32.totalorder %s24, 0
      %p170 = por %p168, %p169
      %s172 = sadd.s32 %s171, 1
      %p175 = scmp.eq.s32.totalorder %s18, 1
      %p176 = scmp.ne.s32.totalorder %s171, %s173
      %p177 = scmp.eq.s32.totalorder %s18, 0
      %p178 = por %p176, %p177
      %p179 = scmp.ne.s32.totalorder %s171, %s173
      %p180 = scmp.eq.s32.totalorder %s23, 1
      %p181 = por %p179, %p180
      %p182 = scmp.ne.s32.totalorder %s173, %s174
      %p183 = scmp.eq.s32.totalorder %s23, 0
      %p184 = por %p182, %p183
      %p185 = scmp.ne.s32.totalorder %s173, %s174
      %p186 = scmp.eq.s32.totalorder %s24, 1
      %p187 = por %p185, %p186
      %p189 = scmp.ne.s32.totalorder %s174, %s188
      %p190 = scmp.eq.s32.totalorder %s24, 0
      %p191 = por %p189, %p190
      %s192 = ssub.s32 %s25, %s37
      %s193 = ssub.s32 %s26, %s33
      %s194 = sor.u32 %s192, %s193
      %p195 = scmp.eq.s32.totalorder %s194, 0
      %s197 = sadd.s32 %s196, 1
      %s198 = scalar_select %p195, %s196, %s197
      %p201 = pneg %p195
      %p202 = scmp.eq.s32.totalorder %s18, 1
      %p203 = por %p201, %p202
      %p204 = scmp.ne.s32.totalorder %s196, %s199
      %p205 = scmp.eq.s32.totalorder %s18, 0
      %p206 = por %p204, %p205
      %p207 = scmp.ne.s32.totalorder %s196, %s199
      %p208 = scmp.eq.s32.totalorder %s23, 1
      %p209 = por %p207, %p208
      %p210 = scmp.ne.s32.totalorder %s199, %s200
      %p211 = scmp.eq.s32.totalorder %s23, 0
      %p212 = por %p210, %p211
      %p213 = scmp.ne.s32.totalorder %s199, %s200
      %p214 = scmp.eq.s32.totalorder %s24, 1
      %p215 = por %p213, %p214
      %p217 = scmp.ne.s32.totalorder %s200, %s216
      %p218 = scmp.eq.s32.totalorder %s24, 0
      %p219 = por %p217, %p218
      %p220 = scmp.le.s32.totalorder 1, %s18
      %p221 = scmp.lt.s32.totalorder %s18, 3
      %p222 = pnand %p220, %p221
      %p223 = pneg %p222
      // Predicated region
      $region9: #{tpu_custom_call.1} parent=5 // pred_check
        _
      $region10: #{tpu_custom_call.1} parent=5 // pred_check_branch
        %225 = sbr.rel (%p222) target = $region12
      $region11: #{tpu_custom_call.1} parent=5 // pred_region
        %s226 = ssub.s32 %s18, 1
        // Predicated region
        $region13: #{tpu_custom_call.1} parent=11 // pred_check
          %p227 = pneg %p79
        $region14: #{tpu_custom_call.1} parent=11 // pred_check_branch
          %229 = sbr.rel (%p227) target = $region16
        $region15: #{tpu_custom_call.1} parent=11 // pred_region
          %231 = vsyncadd [#allocation5], 0
          %s232 = sshll.u32 %s1, 4
          %s233 = int_to_ptr.hbm [resolvable:$true] %s232
          %s234 = sshll.u32 [#allocation4], 4
          %s235 = int_to_ptr.vmem [resolvable:$true] %s234
          %240 = dma.hbm_to_vmem [thread:$0]  %s233, 128, %s235, [#allocation5], 64, 64, 4
        $region16: #{tpu_custom_call.1} parent=11 // pred_fallthru
          _
        // Predicated region
        $region17: #{tpu_custom_call.1} parent=11 // pred_check
          %p241 = pneg %p100
        $region18: #{tpu_custom_call.1} parent=11 // pred_check_branch
          %243 = sbr.rel (%p241) target = $region20
        $region19: #{tpu_custom_call.1} parent=11 // pred_region
          _
        $region20: #{tpu_custom_call.1} parent=11 // pred_fallthru
          _
        // Predicated region
        $region21: #{tpu_custom_call.1} parent=11 // pred_check
          %p244 = pneg %p121
        $region22: #{tpu_custom_call.1} parent=11 // pred_check_branch
          %246 = sbr.rel (%p244) target = $region24
        $region23: #{tpu_custom_call.1} parent=11 // pred_region
          %248 = vsyncadd [#allocation5], 0
          %s249 = sshll.u32 %s3, 4
          %s250 = int_to_ptr.hbm [resolvable:$true] %s249
          %s251 = sshll.u32 [#allocation6], 4
          %s252 = int_to_ptr.vmem [resolvable:$true] %s251
          %257 = dma.hbm_to_vmem [thread:$0]  %s250, 128, %s252, [#allocation5], 64, 64, 4
        $region24: #{tpu_custom_call.1} parent=11 // pred_fallthru
          _
        // Predicated region
        $region25: #{tpu_custom_call.1} parent=11 // pred_check
          %p258 = pneg %p142
        $region26: #{tpu_custom_call.1} parent=11 // pred_check_branch
          %260 = sbr.rel (%p258) target = $region28
        $region27: #{tpu_custom_call.1} parent=11 // pred_region
          _
        $region28: #{tpu_custom_call.1} parent=11 // pred_fallthru
          _
        // Predicated region
        $region29: #{tpu_custom_call.1} parent=11 // pred_check
          %p261 = pneg %p163
        $region30: #{tpu_custom_call.1} parent=11 // pred_check_branch
          %263 = sbr.rel (%p261) target = $region32
        $region31: #{tpu_custom_call.1} parent=11 // pred_region
          %265 = vsyncadd [#allocation8], 0
          %s266 = sshll.u32 %s5, 4
          %s267 = int_to_ptr.hbm [resolvable:$true] %s266
          %s268 = sshll.u32 [#allocation7], 4
          %s269 = int_to_ptr.vmem [resolvable:$true] %s268
          %274 = dma.hbm_to_vmem [thread:$0]  %s267, 128, %s269, [#allocation8], 64, 64, 4
        $region32: #{tpu_custom_call.1} parent=11 // pred_fallthru
          _
        // Predicated region
        $region33: #{tpu_custom_call.1} parent=11 // pred_check
          %p275 = pneg %p184
        $region34: #{tpu_custom_call.1} parent=11 // pred_check_branch
          %277 = sbr.rel (%p275) target = $region36
        $region35: #{tpu_custom_call.1} parent=11 // pred_region
          _
        $region36: #{tpu_custom_call.1} parent=11 // pred_fallthru
          _
      $region12: #{tpu_custom_call.1} parent=5 // pred_fallthru
        _
      %p278 = scmp.lt.s32.totalorder %s18, 2
      // Predicated region
      $region37: #{tpu_custom_call.1} parent=5 // pred_check
        %p279 = pneg %p278
      $region38: #{tpu_custom_call.1} parent=5 // pred_check_branch
        %281 = sbr.rel (%p279) target = $region40
      $region39: #{tpu_custom_call.1} parent=5 // pred_region
        // Predicated region
        $region41: #{tpu_custom_call.1} parent=39 // pred_check
          %p282 = pneg %p52
        $region42: #{tpu_custom_call.1} parent=39 // pred_check_branch
          %284 = sbr.rel (%p282) target = $region44
        $region43: #{tpu_custom_call.1} parent=39 // pred_region
          %s285 = sand.u32 %s42, 1
          %s286 = scalar_lea.sflag [#allocation3], %s285
          %s287 = sand.u32 %s42, 1
          %s288 = smul.addr %s287, 64
          %s289 = scalar_lea.vmem [#allocation2], %s288
          %s290 = smul.u32 8, %s26
          %292 = vsyncadd %s286, 0
          %s293 = smul.addr %s290, 2
          %s294 = smul.addr %s25, 16
          %s295 = sadd.s32 %s293, %s294
          %s296 = smul.addr %s295, 4
          %s297 = scalar_lea.hbm %s0, %s296
          %s298 = sshll.u32 %s297, 4
          %s299 = int_to_ptr.hbm [resolvable:$true] %s298
          %s300 = sshll.u32 %s289, 4
          %s301 = int_to_ptr.vmem [resolvable:$true] %s300
          %306 = dma.hbm_to_vmem [thread:$0]  %s299, 1024, %s301, %s286, 64, 64, 4
        $region44: #{tpu_custom_call.1} parent=39 // pred_fallthru
          _
      $region40: #{tpu_custom_call.1} parent=5 // pred_fallthru
        _
      %p307 = scmp.le.s32.totalorder 1, %s18
      %p308 = scmp.lt.s32.totalorder %s18, 3
      %p309 = pnand %p307, %p308
      %p310 = pneg %p309
      // Predicated region
      $region45: #{tpu_custom_call.1} parent=5 // pred_check
        _
      $region46: #{tpu_custom_call.1} parent=5 // pred_check_branch
        %312 = sbr.rel (%p309) target = $region48
      $region47: #{tpu_custom_call.1} parent=5 // pred_region
        %s313 = ssub.s32 %s18, 1
        %s314 = sand.u32 %s45, 1
        %s315 = scalar_lea.sflag [#allocation3], %s314
        %s316 = sand.u32 %s45, 1
        %s317 = smul.addr %s316, 64
        %s318 = scalar_lea.vmem [#allocation2], %s317
        // Predicated region
        $region49: #{tpu_custom_call.1} parent=47 // pred_check
          %p319 = pneg %p58
        $region50: #{tpu_custom_call.1} parent=47 // pred_check_branch
          %321 = sbr.rel (%p319) target = $region52
        $region51: #{tpu_custom_call.1} parent=47 // pred_region
          %323 = dma.done %s315, 1024
        $region52: #{tpu_custom_call.1} parent=47 // pred_fallthru
          _
        // Predicated region
        $region53: #{tpu_custom_call.1} parent=47 // pred_check
          %p324 = pneg %p79
        $region54: #{tpu_custom_call.1} parent=47 // pred_check_branch
          %326 = sbr.rel (%p324) target = $region56
        $region55: #{tpu_custom_call.1} parent=47 // pred_region
          %328 = dma.done [#allocation5], 128
        $region56: #{tpu_custom_call.1} parent=47 // pred_fallthru
          _
        // Predicated region
        $region57: #{tpu_custom_call.1} parent=47 // pred_check
          %p329 = pneg %p121
        $region58: #{tpu_custom_call.1} parent=47 // pred_check_branch
          %331 = sbr.rel (%p329) target = $region60
        $region59: #{tpu_custom_call.1} parent=47 // pred_region
          %333 = dma.done [#allocation5], 128
        $region60: #{tpu_custom_call.1} parent=47 // pred_fallthru
          _
        // Predicated region
        $region61: #{tpu_custom_call.1} parent=47 // pred_check
          %p334 = pneg %p163
        $region62: #{tpu_custom_call.1} parent=47 // pred_check_branch
          %336 = sbr.rel (%p334) target = $region64
        $region63: #{tpu_custom_call.1} parent=47 // pred_region
          %338 = dma.done [#allocation8], 128
        $region64: #{tpu_custom_call.1} parent=47 // pred_fallthru
          _
        %s339 = sand.u32 %s45, 1
        %s340 = scalar_lea.sflag [#allocation3], %s339
        %s341 = sand.u32 %s45, 1
        %s342 = smul.addr %s341, 64
        %s343 = scalar_lea.vmem [#allocation2], %s342
        %p344 = pneg %p58
        %p345 = pneg %p55
        %p346 = pneg %p79
        %p347 = pneg %p76
        %p348 = pneg %p100
        %p349 = pneg %p97
        %p350 = pneg %p121
        %p351 = pneg %p118
        %p352 = pneg %p142
        %p353 = pneg %p139
        %p354 = pneg %p163
        %p355 = pneg %p160
        %p356 = pneg %p184
        %p357 = pneg %p181
        %p358 = pneg %p212
        %p359 = pneg %p209
        %p360 = scmp.lt.s32.totalorder %s27, 1
        %s361 = scalar_select %p360, %s27, 1
        %p362 = scmp.lt.s32.totalorder %s28, 0
        %s363 = scalar_select %p362, %s28, 0
        %s364 = smul.addr %s361, 4
        %s365 = sadd.s32 %s363, %s364
        %s366 = smul.addr %s365, 8
        %s367 = scalar_lea.vmem %s7, %s366
        %s368 = smul.u32 8, %s28
        %p369 = scmp.lt.s32.totalorder %s27, 1
        %s370 = scalar_select %p369, %s27, 1
        %p371 = scmp.lt.s32.totalorder %s28, 0
        %s372 = scalar_select %p371, %s28, 0
        %s373 = smul.addr %s370, 4
        %s374 = sadd.s32 %s372, %s373
        %s375 = smul.addr %s374, 8
        %s376 = scalar_lea.vmem %s7, %s375
        %v378 = vld [vmem:[%s318] sm:$0xf]
        %v379 = vld [vmem:[%s318 + $0x4] sm:$0xf]
        %v380 = vld [vmem:[%s318 + $0x8] sm:$0xf]
        %v381 = vld [vmem:[%s318 + $0xc] sm:$0xf]
        %v382 = vld [vmem:[%s318 + $0x10] sm:$0xf]
        %v383 = vld [vmem:[%s318 + $0x14] sm:$0xf]
        %v384 = vld [vmem:[%s318 + $0x18] sm:$0xf]
        %v385 = vld [vmem:[%s318 + $0x1c] sm:$0xf]
        %v386 = vld [vmem:[%s318 + $0x20] sm:$0xf]
        %v387 = vld [vmem:[%s318 + $0x24] sm:$0xf]
        %v388 = vld [vmem:[%s318 + $0x28] sm:$0xf]
        %v389 = vld [vmem:[%s318 + $0x2c] sm:$0xf]
        %v390 = vld [vmem:[%s318 + $0x30] sm:$0xf]
        %v391 = vld [vmem:[%s318 + $0x34] sm:$0xf]
        %v392 = vld [vmem:[%s318 + $0x38] sm:$0xf]
        %v393 = vld [vmem:[%s318 + $0x3c] sm:$0xf]
        %v394 = vld [vmem:[#allocation4] sm:$0xf]
        %v395 = vld [vmem:[#allocation4 + $0x4] sm:$0xf]
        %v396 = vld [vmem:[%s2] sm:$0x1]
        %v398 = vperm.slane %v396, 0
        %v416 = vunpack.c.l.b16 %v378
        %v417 = vunpack.c.l.b16 %v379
        %v418 = vunpack.c.l.b16 %v380
        %v419 = vunpack.c.l.b16 %v381
        %v420 = vunpack.c.l.b16 %v382
        %v421 = vunpack.c.l.b16 %v383
        %v422 = vunpack.c.l.b16 %v384
        %v423 = vunpack.c.l.b16 %v385
        %v424 = vunpack.c.l.b16 %v386
        %v425 = vunpack.c.l.b16 %v387
        %v426 = vunpack.c.l.b16 %v388
        %v427 = vunpack.c.l.b16 %v389
        %v428 = vunpack.c.l.b16 %v390
        %v429 = vunpack.c.l.b16 %v391
        %v430 = vunpack.c.l.b16 %v392
        %v431 = vunpack.c.l.b16 %v393
        %v432 = vpack.c.b16 %v417, %v416
        %v433 = vpack.c.b16 %v419, %v418
        %v434 = vpack.c.b16 %v421, %v420
        %v435 = vpack.c.b16 %v423, %v422
        %v436 = vpack.c.b16 %v425, %v424
        %v437 = vpack.c.b16 %v427, %v426
        %v438 = vpack.c.b16 %v429, %v428
        %v439 = vpack.c.b16 %v431, %v430
        %v442 = vunpack.c.l.b16 %v394
        %v443 = vunpack.c.l.b16 %v395
        %v444 = vpack.c.b16 %v443, %v442
        %vm446 = vcmask 130048
        %v448 = vsel %vm446, %v432, 0
        %v451 = vsel %vm446, %v433, 0
        %v454 = vsel %vm446, %v434, 0
        %v457 = vsel %vm446, %v435, 0
        %v460 = vsel %vm446, %v436, 0
        %v463 = vsel %vm446, %v437, 0
        %v466 = vsel %vm446, %v438, 0
        %v469 = vsel %vm446, %v439, 0
        %471 = vmatpush.bf16.msra.mxu0 0
        %472 = vmatpush.bf16.msra.mxu0 0
        %473 = vmatpush.bf16.msra.mxu0 0
        %474 = vmatpush.bf16.msra.mxu0 0
        %475 = vmatpush.bf16.msra.mxu0 0
        %476 = vmatpush.bf16.msra.mxu0 0
        %477 = vmatpush.bf16.msra.mxu0 0
        %478 = vmatpush.bf16.msra.mxu0 %v444
        %479 = vmatmul.bf16.gmra.mxu0 %v448
        %v480 = vpop.f32.mrf.mxu0
        %v481 = vadd.f32 %v398, %v480
        %v482 = vpop.f32.mrf.mxu0
        %v483 = vadd.f32 %v398, %v482
        %484 = vmatmul.bf16.gmra.mxu0 %v451
        %v485 = vpop.f32.mrf.mxu0
        %v486 = vadd.f32 %v398, %v485
        %v487 = vpop.f32.mrf.mxu0
        %v488 = vadd.f32 %v398, %v487
        %489 = vmatmul.bf16.gmra.mxu0 %v454
        %v490 = vpop.f32.mrf.mxu0
        %v491 = vadd.f32 %v398, %v490
        %v492 = vpop.f32.mrf.mxu0
        %v493 = vadd.f32 %v398, %v492
        %494 = vmatmul.bf16.gmra.mxu0 %v457
        %v495 = vpop.f32.mrf.mxu0
        %v496 = vadd.f32 %v398, %v495
        %v497 = vpop.f32.mrf.mxu0
        %v498 = vadd.f32 %v398, %v497
        %499 = vmatmul.bf16.gmra.mxu0 %v460
        %v500 = vpop.f32.mrf.mxu0
        %v501 = vadd.f32 %v398, %v500
        %v502 = vpop.f32.mrf.mxu0
        %v503 = vadd.f32 %v398, %v502
        %504 = vmatmul.bf16.gmra.mxu0 %v463
        %v505 = vpop.f32.mrf.mxu0
        %v506 = vadd.f32 %v398, %v505
        %v507 = vpop.f32.mrf.mxu0
        %v508 = vadd.f32 %v398, %v507
        %509 = vmatmul.bf16.gmra.mxu0 %v466
        %v510 = vpop.f32.mrf.mxu0
        %v511 = vadd.f32 %v398, %v510
        %v512 = vpop.f32.mrf.mxu0
        %v513 = vadd.f32 %v398, %v512
        %514 = vmatmul.bf16.gmra.mxu0 %v469
        %v515 = vpop.f32.mrf.mxu0
        %v516 = vadd.f32 %v398, %v515
        %v517 = vpop.f32.mrf.mxu0
        %v518 = vadd.f32 %v398, %v517
        %519 = vdwg.mxu0
        %v520 = vmax.f32 %v481, 0.0
        %v521 = vmax.f32 %v483, 0.0
        %v522 = vmax.f32 %v486, 0.0
        %v523 = vmax.f32 %v488, 0.0
        %v524 = vmax.f32 %v491, 0.0
        %v525 = vmax.f32 %v493, 0.0
        %v526 = vmax.f32 %v496, 0.0
        %v527 = vmax.f32 %v498, 0.0
        %v528 = vmax.f32 %v501, 0.0
        %v529 = vmax.f32 %v503, 0.0
        %v530 = vmax.f32 %v506, 0.0
        %v531 = vmax.f32 %v508, 0.0
        %v532 = vmax.f32 %v511, 0.0
        %v533 = vmax.f32 %v513, 0.0
        %v534 = vmax.f32 %v516, 0.0
        %v535 = vmax.f32 %v518, 0.0
        %v536 = vpack.c.bf16 %v521, %v520
        %v537 = vpack.c.bf16 %v523, %v522
        %v538 = vpack.c.bf16 %v525, %v524
        %v539 = vpack.c.bf16 %v527, %v526
        %v540 = vpack.c.bf16 %v529, %v528
        %v541 = vpack.c.bf16 %v531, %v530
        %v542 = vpack.c.bf16 %v533, %v532
        %v543 = vpack.c.bf16 %v535, %v534
        %v544 = vld [vmem:[#allocation6] sm:$0xf]
        %v545 = vld [vmem:[#allocation6 + $0x4] sm:$0xf]
        %v546 = vld [vmem:[%s4] sm:$0x1]
        %v548 = vperm.slane %v546, 0
        %v552 = vunpack.c.l.b16 %v544
        %v553 = vunpack.c.l.b16 %v545
        %v554 = vpack.c.b16 %v553, %v552
        %v557 = vsel %vm446, %v536, 0
        %v560 = vsel %vm446, %v537, 0
        %v563 = vsel %vm446, %v538, 0
        %v566 = vsel %vm446, %v539, 0
        %v569 = vsel %vm446, %v540, 0
        %v572 = vsel %vm446, %v541, 0
        %v575 = vsel %vm446, %v542, 0
        %v578 = vsel %vm446, %v543, 0
        %580 = vmatpush.bf16.msra.mxu0 0
        %581 = vmatpush.bf16.msra.mxu0 0
        %582 = vmatpush.bf16.msra.mxu0 0
        %583 = vmatpush.bf16.msra.mxu0 0
        %584 = vmatpush.bf16.msra.mxu0 0
        %585 = vmatpush.bf16.msra.mxu0 0
        %586 = vmatpush.bf16.msra.mxu0 0
        %587 = vmatpush.bf16.msra.mxu0 %v554
        %588 = vmatmul.bf16.gmra.mxu0 %v557
        %v589 = vpop.f32.mrf.mxu0
        %v590 = vadd.f32 %v548, %v589
        %v591 = vpop.f32.mrf.mxu0
        %v592 = vadd.f32 %v548, %v591
        %593 = vmatmul.bf16.gmra.mxu0 %v560
        %v594 = vpop.f32.mrf.mxu0
        %v595 = vadd.f32 %v548, %v594
        %v596 = vpop.f32.mrf.mxu0
        %v597 = vadd.f32 %v548, %v596
        %598 = vmatmul.bf16.gmra.mxu0 %v563
        %v599 = vpop.f32.mrf.mxu0
        %v600 = vadd.f32 %v548, %v599
        %v601 = vpop.f32.mrf.mxu0
        %v602 = vadd.f32 %v548, %v601
        %603 = vmatmul.bf16.gmra.mxu0 %v566
        %v604 = vpop.f32.mrf.mxu0
        %v605 = vadd.f32 %v548, %v604
        %v606 = vpop.f32.mrf.mxu0
        %v607 = vadd.f32 %v548, %v606
        %608 = vmatmul.bf16.gmra.mxu0 %v569
        %v609 = vpop.f32.mrf.mxu0
        %v610 = vadd.f32 %v548, %v609
        %v611 = vpop.f32.mrf.mxu0
        %v612 = vadd.f32 %v548, %v611
        %613 = vmatmul.bf16.gmra.mxu0 %v572
        %v614 = vpop.f32.mrf.mxu0
        %v615 = vadd.f32 %v548, %v614
        %v616 = vpop.f32.mrf.mxu0
        %v617 = vadd.f32 %v548, %v616
        %618 = vmatmul.bf16.gmra.mxu0 %v575
        %v619 = vpop.f32.mrf.mxu0
        %v620 = vadd.f32 %v548, %v619
        %v621 = vpop.f32.mrf.mxu0
        %v622 = vadd.f32 %v548, %v621
        %623 = vmatmul.bf16.gmra.mxu0 %v578
        %v624 = vpop.f32.mrf.mxu0
        %v625 = vadd.f32 %v548, %v624
        %v626 = vpop.f32.mrf.mxu0
        %v627 = vadd.f32 %v548, %v626
        %628 = vdwg.mxu0
        %v629 = vmax.f32 %v590, 0.0
        %v630 = vmax.f32 %v592, 0.0
        %v631 = vmax.f32 %v595, 0.0
        %v632 = vmax.f32 %v597, 0.0
        %v633 = vmax.f32 %v600, 0.0
        %v634 = vmax.f32 %v602, 0.0
        %v635 = vmax.f32 %v605, 0.0
        %v636 = vmax.f32 %v607, 0.0
        %v637 = vmax.f32 %v610, 0.0
        %v638 = vmax.f32 %v612, 0.0
        %v639 = vmax.f32 %v615, 0.0
        %v640 = vmax.f32 %v617, 0.0
        %v641 = vmax.f32 %v620, 0.0
        %v642 = vmax.f32 %v622, 0.0
        %v643 = vmax.f32 %v625, 0.0
        %v644 = vmax.f32 %v627, 0.0
        %v645 = vpack.c.bf16 %v630, %v629
        %v646 = vpack.c.bf16 %v632, %v631
        %v647 = vpack.c.bf16 %v634, %v633
        %v648 = vpack.c.bf16 %v636, %v635
        %v649 = vpack.c.bf16 %v638, %v637
        %v650 = vpack.c.bf16 %v640, %v639
        %v651 = vpack.c.bf16 %v642, %v641
        %v652 = vpack.c.bf16 %v644, %v643
        %v653 = vld [vmem:[#allocation7] sm:$0xf]
        %v654 = vld [vmem:[#allocation7 + $0x4] sm:$0xf]
        %v655 = vld [vmem:[%s6] sm:$0x1]
        %v657 = vperm.slane %v655, 0
        %v661 = vunpack.c.l.b16 %v653
        %v662 = vunpack.c.l.b16 %v654
        %v663 = vpack.c.b16 %v662, %v661
        %v666 = vsel %vm446, %v645, 0
        %v669 = vsel %vm446, %v646, 0
        %v672 = vsel %vm446, %v647, 0
        %v675 = vsel %vm446, %v648, 0
        %v678 = vsel %vm446, %v649, 0
        %v681 = vsel %vm446, %v650, 0
        %v684 = vsel %vm446, %v651, 0
        %v687 = vsel %vm446, %v652, 0
        %689 = vmatpush.bf16.msra.mxu0 0
        %690 = vmatpush.bf16.msra.mxu0 0
        %691 = vmatpush.bf16.msra.mxu0 0
        %692 = vmatpush.bf16.msra.mxu0 0
        %693 = vmatpush.bf16.msra.mxu0 0
        %694 = vmatpush.bf16.msra.mxu0 0
        %695 = vmatpush.bf16.msra.mxu0 0
        %696 = vmatpush.bf16.msra.mxu0 %v663
        %697 = vmatmul.bf16.gmra.mxu0 %v666
        %v698 = vpop.f32.mrf.mxu0
        %v699 = vadd.f32 %v657, %v698
        %v700 = vpop.f32.mrf.mxu0
        %v701 = vadd.f32 %v657, %v700
        %702 = vmatmul.bf16.gmra.mxu0 %v669
        %v703 = vpop.f32.mrf.mxu0
        %v704 = vadd.f32 %v657, %v703
        %v705 = vpop.f32.mrf.mxu0
        %v706 = vadd.f32 %v657, %v705
        %707 = vmatmul.bf16.gmra.mxu0 %v672
        %v708 = vpop.f32.mrf.mxu0
        %v709 = vadd.f32 %v657, %v708
        %v710 = vpop.f32.mrf.mxu0
        %v711 = vadd.f32 %v657, %v710
        %712 = vmatmul.bf16.gmra.mxu0 %v675
        %v713 = vpop.f32.mrf.mxu0
        %v714 = vadd.f32 %v657, %v713
        %v715 = vpop.f32.mrf.mxu0
        %v716 = vadd.f32 %v657, %v715
        %717 = vmatmul.bf16.gmra.mxu0 %v678
        %v718 = vpop.f32.mrf.mxu0
        %v719 = vadd.f32 %v657, %v718
        %v720 = vpop.f32.mrf.mxu0
        %v721 = vadd.f32 %v657, %v720
        %722 = vmatmul.bf16.gmra.mxu0 %v681
        %v723 = vpop.f32.mrf.mxu0
        %v724 = vadd.f32 %v657, %v723
        %v725 = vpop.f32.mrf.mxu0
        %v726 = vadd.f32 %v657, %v725
        %727 = vmatmul.bf16.gmra.mxu0 %v684
        %v728 = vpop.f32.mrf.mxu0
        %v729 = vadd.f32 %v657, %v728
        %v730 = vpop.f32.mrf.mxu0
        %v731 = vadd.f32 %v657, %v730
        %732 = vmatmul.bf16.gmra.mxu0 %v687
        %v733 = vpop.f32.mrf.mxu0
        %v734 = vadd.f32 %v657, %v733
        %v735 = vpop.f32.mrf.mxu0
        %v736 = vadd.f32 %v657, %v735
        %737 = vdwg.mxu0
        %v738 = vmax.f32 %v699, 0.0
        %v739 = vmax.f32 %v701, 0.0
        %v740 = vmax.f32 %v704, 0.0
        %v741 = vmax.f32 %v706, 0.0
        %v742 = vmax.f32 %v709, 0.0
        %v743 = vmax.f32 %v711, 0.0
        %v744 = vmax.f32 %v714, 0.0
        %v745 = vmax.f32 %v716, 0.0
        %v746 = vmax.f32 %v719, 0.0
        %v747 = vmax.f32 %v721, 0.0
        %v748 = vmax.f32 %v724, 0.0
        %v749 = vmax.f32 %v726, 0.0
        %v750 = vmax.f32 %v729, 0.0
        %v751 = vmax.f32 %v731, 0.0
        %v752 = vmax.f32 %v734, 0.0
        %v753 = vmax.f32 %v736, 0.0
        %vm754 = vcmask 261120
        %v755 = vsel %vm754, %v738, -inf
        %v756 = vsel %vm754, %v739, -inf
        %v757 = vmax.f32 %v755, %v756
        %v758 = vrot.slane %v757, 4
        %v759 = vmax.f32 %v757, %v758
        %v760 = vrot.slane %v759, 2
        %v761 = vmax.f32 %v759, %v760
        %v762 = vrot.slane %v761, 1
        %v763 = vmax.f32 %v761, %v762
        %v764 = vsel %vm754, %v740, -inf
        %v765 = vsel %vm754, %v741, -inf
        %v766 = vmax.f32 %v764, %v765
        %v767 = vrot.slane %v766, 4
        %v768 = vmax.f32 %v766, %v767
        %v769 = vrot.slane %v768, 2
        %v770 = vmax.f32 %v768, %v769
        %v771 = vrot.slane %v770, 1
        %v772 = vmax.f32 %v770, %v771
        %v773 = vsel %vm754, %v742, -inf
        %v774 = vsel %vm754, %v743, -inf
        %v775 = vmax.f32 %v773, %v774
        %v776 = vrot.slane %v775, 4
        %v777 = vmax.f32 %v775, %v776
        %v778 = vrot.slane %v777, 2
        %v779 = vmax.f32 %v777, %v778
        %v780 = vrot.slane %v779, 1
        %v781 = vmax.f32 %v779, %v780
        %v782 = vsel %vm754, %v744, -inf
        %v783 = vsel %vm754, %v745, -inf
        %v784 = vmax.f32 %v782, %v783
        %v785 = vrot.slane %v784, 4
        %v786 = vmax.f32 %v784, %v785
        %v787 = vrot.slane %v786, 2
        %v788 = vmax.f32 %v786, %v787
        %v789 = vrot.slane %v788, 1
        %v790 = vmax.f32 %v788, %v789
        %v791 = vsel %vm754, %v746, -inf
        %v792 = vsel %vm754, %v747, -inf
        %v793 = vmax.f32 %v791, %v792
        %v794 = vrot.slane %v793, 4
        %v795 = vmax.f32 %v793, %v794
        %v796 = vrot.slane %v795, 2
        %v797 = vmax.f32 %v795, %v796
        %v798 = vrot.slane %v797, 1
        %v799 = vmax.f32 %v797, %v798
        %v800 = vsel %vm754, %v748, -inf
        %v801 = vsel %vm754, %v749, -inf
        %v802 = vmax.f32 %v800, %v801
        %v803 = vrot.slane %v802, 4
        %v804 = vmax.f32 %v802, %v803
        %v805 = vrot.slane %v804, 2
        %v806 = vmax.f32 %v804, %v805
        %v807 = vrot.slane %v806, 1
        %v808 = vmax.f32 %v806, %v807
        %v809 = vsel %vm754, %v750, -inf
        %v810 = vsel %vm754, %v751, -inf
        %v811 = vmax.f32 %v809, %v810
        %v812 = vrot.slane %v811, 4
        %v813 = vmax.f32 %v811, %v812
        %v814 = vrot.slane %v813, 2
        %v815 = vmax.f32 %v813, %v814
        %v816 = vrot.slane %v815, 1
        %v817 = vmax.f32 %v815, %v816
        %v818 = vsel %vm754, %v752, -inf
        %v819 = vsel %vm754, %v753, -inf
        %v820 = vmax.f32 %v818, %v819
        %v821 = vrot.slane %v820, 4
        %v822 = vmax.f32 %v820, %v821
        %v823 = vrot.slane %v822, 2
        %v824 = vmax.f32 %v822, %v823
        %v825 = vrot.slane %v824, 1
        %v826 = vmax.f32 %v824, %v825
        %vm835 = vcmask 1041409
        %v836 = vsel %vm835, %v772, %v763
        %vm837 = vcmask 1042434
        %v838 = vsel %vm837, %v781, %v836
        %vm839 = vcmask 1043459
        %v840 = vsel %vm839, %v790, %v838
        %vm841 = vcmask 1044484
        %v842 = vsel %vm841, %v799, %v840
        %vm843 = vcmask 1045509
        %v844 = vsel %vm843, %v808, %v842
        %vm845 = vcmask 1046534
        %v846 = vsel %vm845, %v817, %v844
        %vm847 = vcmask 1047559
        %v848 = vsel %vm847, %v826, %v846
        %850 = vxpose.xlu0.b32.start [1/16] %v848, 128
        %851 = vxpose.xlu0.b32.cont [2/16] 0.0, 128
        %852 = vxpose.xlu0.b32.cont [3/16] 0.0, 128
        %853 = vxpose.xlu0.b32.cont [4/16] 0.0, 128
        %854 = vxpose.xlu0.b32.cont [5/16] 0.0, 128
        %855 = vxpose.xlu0.b32.cont [6/16] 0.0, 128
        %856 = vxpose.xlu0.b32.cont [7/16] 0.0, 128
        %857 = vxpose.xlu0.b32.cont [8/16] 0.0, 128
        %858 = vxpose.xlu0.b32.cont [9/16] 0.0, 128
        %859 = vxpose.xlu0.b32.cont [10/16] 0.0, 128
        %860 = vxpose.xlu0.b32.cont [11/16] 0.0, 128
        %861 = vxpose.xlu0.b32.cont [12/16] 0.0, 128
        %862 = vxpose.xlu0.b32.cont [13/16] 0.0, 128
        %863 = vxpose.xlu0.b32.cont [14/16] 0.0, 128
        %864 = vxpose.xlu0.b32.cont [15/16] 0.0, 128
        %865 = vxpose.xlu0.b32.end [16/16] 0.0, 128
        %v866 = vpop.trf.xlu0
        %v867 = vpop.trf.xlu0
        %v868 = vpop.trf.xlu0
        %v869 = vpop.trf.xlu0
        %v870 = vpop.trf.xlu0
        %v871 = vpop.trf.xlu0
        %v872 = vpop.trf.xlu0
        %v873 = vpop.trf.xlu0
        %v874 = vpop.trf.xlu0
        %v875 = vpop.trf.xlu0
        %v876 = vpop.trf.xlu0
        %v877 = vpop.trf.xlu0
        %v878 = vpop.trf.xlu0
        %v879 = vpop.trf.xlu0
        %v880 = vpop.trf.xlu0
        %v881 = vpop.trf.xlu0
        %vm882 = vcmask 64512
        %883 = vst.msk [vmem:[%s376] sm:$0xff] %vm882, %v866
        %884 = vst.msk [vmem:[%s376 + $0x8] sm:$0xff] %vm882, %v867
        %885 = vst.msk [vmem:[%s376 + $0x10] sm:$0xff] %vm882, %v868
        %886 = vst.msk [vmem:[%s376 + $0x18] sm:$0xff] %vm882, %v869
        %p887 = scmp.lt.s32.totalorder %s27, 1
        %s888 = scalar_select %p887, %s27, 1
        %p889 = scmp.lt.s32.totalorder %s28, 0
        %s890 = scalar_select %p889, %s28, 0
        %s891 = smul.addr %s888, 4
        %s892 = sadd.s32 %s890, %s891
        %s893 = smul.addr %s892, 8
        %s894 = scalar_lea.vmem %s7, %s893
        // Predicated region
        $region65: #{tpu_custom_call.1} parent=47 // pred_check
          %p895 = pneg %p209
        $region66: #{tpu_custom_call.1} parent=47 // pred_check_branch
          %897 = sbr.rel (%p895) target = $region68
        $region67: #{tpu_custom_call.1} parent=47 // pred_region
          _
        $region68: #{tpu_custom_call.1} parent=47 // pred_fallthru
          _
      $region48: #{tpu_custom_call.1} parent=5 // pred_fallthru
        _
      %p898 = scmp.le.s32.totalorder 2, %s18
      // Predicated region
      $region69: #{tpu_custom_call.1} parent=5 // pred_check
        %p899 = pneg %p898
      $region70: #{tpu_custom_call.1} parent=5 // pred_check_branch
        %901 = sbr.rel (%p899) target = $region72
      $region71: #{tpu_custom_call.1} parent=5 // pred_region
        %s902 = ssub.s32 %s18, 2
        // Predicated region
        $region73: #{tpu_custom_call.1} parent=71 // pred_check
          %p903 = pneg %p215
        $region74: #{tpu_custom_call.1} parent=71 // pred_check_branch
          %905 = sbr.rel (%p903) target = $region76
        $region75: #{tpu_custom_call.1} parent=71 // pred_region
          %p906 = scmp.lt.s32.totalorder %s29, 1
          %s907 = scalar_select %p906, %s29, 1
          %p908 = scmp.lt.s32.totalorder %s30, 0
          %s909 = scalar_select %p908, %s30, 0
          %s910 = smul.addr %s907, 4
          %s911 = sadd.s32 %s909, %s910
          %s912 = smul.addr %s911, 8
          %s913 = scalar_lea.vmem %s7, %s912
        $region76: #{tpu_custom_call.1} parent=71 // pred_fallthru
          _
      $region72: #{tpu_custom_call.1} parent=5 // pred_fallthru
        _
    $region6: #{tpu_custom_call.1} parent=1 // loop_footer
      %s22 = sadd.s32 1, %s18
    $region7: #{tpu_custom_call.1} parent=1 // loop_footer_branch
      %17 = sbr.rel target = $region3
    $region8: #{tpu_custom_call.1} parent=1 // loop_exit
      _
    %914 = vsyncpa [#allocation3], 1
    %s915 = scalar_lea.sflag [#allocation3], 1
    %916 = vsyncpa %s915, 1
    %917 = vsyncpa [#allocation5], 1
    %918 = vsyncpa [#allocation8], 1

</llo_original>
